<compile_context>
chip_gen: v7x
topology: tpu7x:2x2x1
jax: 0.10.0
libtpu: 0.0.40
codegen_flags: <defaults>
</compile_context>

<pallas_src>
import math

import jax
import jax.numpy as jnp
from jax.experimental import pallas as pl
from jax.experimental.pallas import tpu as pltpu

COUT, CIN, KH, KW = 3, 3, 3, 3
NUM_CAT = 4
BN_EPS = 1e-5
SUBLANE = 8


def _make_kernel(l_valid, l_pad, k_taps):
    """Build the fused kernel; l_valid = true number of (n, ho, wo) lanes."""
    inv_count = 1.0 / float(l_valid)

    def kernel(wp_ref, rhs_ref, o_ref):
        # wp_ref : f32[COUT, k_pad]     flattened OIHW conv weight in cols [0, k_taps);
        #                               conv bias / BN gamma / BN beta packed in cols
        #                               k_taps, k_taps+1, k_taps+2.  The matching RHS rows
        #                               are zero, so the packed params never touch the dot.
        # rhs_ref: f32[k_pad, 2*l_pad]  lanes [0, l_pad): im2col(x1);
        #                               lanes [l_pad, 2*l_pad): x2 patch broadcast over lanes.
        # o_ref  : f32[NUM_CAT, 8, l_pad]
        wp = wp_ref[...]
        b = wp[:, k_taps:k_taps + 1]          # conv bias      (COUT, 1)
        g = wp[:, k_taps + 1:k_taps + 2]      # BN gamma       (COUT, 1)
        be = wp[:, k_taps + 2:k_taps + 3]     # BN beta        (COUT, 1)

        # ONE fused MXU matmul covers both convolutions (256-lane RHS).
        r = jnp.dot(wp, rhs_ref[...], preferred_element_type=jnp.float32)  # (COUT, 2*l_pad)
        # conv(x1) WITHOUT bias: a per-channel constant bias cancels inside BatchNorm
        # (y - mean(y)), and dropping it keeps zero-padded lanes at 0 so sums stay exact.
        d = r[:, :l_pad]
        # conv(x2) + bias; x2's output is spatially 1x1 and was pre-broadcast over lanes,
        # so this is already the broadcast add operand.
        y2 = r[:, l_pad:] + b

        # One-pass BatchNorm2d training statistics over (N, H, W) per channel:
        # a single cross-lane reduction over [d ; d*d] (fits one (6,128) sub-vreg).
        stats = jnp.sum(jnp.concatenate([d, d * d], axis=0),
                        axis=-1, keepdims=True)                        # (2*COUT, 1)
        mean = stats[:COUT] * inv_count
        var = jnp.maximum(stats[COUT:] * inv_count - mean * mean, 0.0)
        inv_std = jax.lax.rsqrt(var + BN_EPS)
        res = (d - mean) * (inv_std * g) + be + y2                     # (COUT, l_pad)

        # torch.cat(4 * [y], dim=1) + (broadcast) add: re-store the same tile at the 4
        # group slots.  Pad to a full (8, l_pad) vreg so every store is unmasked.
        res8 = jnp.concatenate(
            [res, jnp.zeros((SUBLANE - COUT, l_pad), jnp.float32)], axis=0)
        for gi in range(NUM_CAT):
            o_ref[gi] = res8

    return kernel


def _conv_bn_cat_add(x1, x2, w, b, gamma, beta):
    n, cin, h, wdim = x1.shape
    assert cin == CIN
    ho, wo = h - KH + 1, wdim - KW + 1
    assert ho >= 1 and wo >= 1
    # The final add only broadcasts cleanly because x2's conv output is spatially 1x1.
    assert x2.shape == (n, CIN, KH, KW), x2.shape

    howo = ho * wo
    l = n * howo
    l_pad = ((l + 127) // 128) * 128
    k = CIN * KH * KW
    k_pad = ((k + 7) // 8) * 8
    assert k_pad - k >= 3  # room for the packed (bias, gamma, beta) columns

    # ---- wrapper-side layout plumbing (all fused under jit) ----
    # im2col(x1) in one HLO; patch channel order is c-major, (kh,kw)-minor => matches OIHW.
    patches = jax.lax.conv_general_dilated_patches(
        x1, (KH, KW), (1, 1), "VALID",
        dimension_numbers=("NCHW", "OIHW", "NCHW"))               # (N, k, Ho, Wo)
    x1p = jnp.transpose(patches.reshape(n, k, howo), (1, 0, 2)).reshape(k, l)

    # x2's single 3x3x3 patch per batch element, broadcast across that batch's lanes.
    x2p = jnp.broadcast_to(x2.reshape(n, 1, k), (n, howo, k)).reshape(l, k).T

    rhs = jnp.concatenate([
        jnp.pad(x1p, ((0, k_pad - k), (0, l_pad - l))),
        jnp.pad(x2p, ((0, k_pad - k), (0, l_pad - l))),
    ], axis=1)                                                      # (k_pad, 2*l_pad)

    # Pack conv bias / BN gamma / BN beta into the zero tail columns of the weight slab.
    wp = jnp.concatenate(
        [w.reshape(COUT, k).astype(jnp.float32),
         jnp.stack([b, gamma, beta], axis=1).astype(jnp.float32)], axis=1)
    wp = jnp.pad(wp, ((0, 0), (0, k_pad - (k + 3))))                # (COUT, k_pad)

    vmem = pl.BlockSpec(memory_space=pltpu.MemorySpace.VMEM)
    flops = 2 * COUT * k_pad * 2 * l_pad + 12 * COUT * l_pad
    bytes_accessed = 4 * (COUT * k_pad + k_pad * 2 * l_pad + NUM_CAT * SUBLANE * l_pad)

    out_pad = pl.pallas_call(
        _make_kernel(l_valid=l, l_pad=l_pad, k_taps=k),
        out_shape=jax.ShapeDtypeStruct((NUM_CAT, SUBLANE, l_pad), jnp.float32),
        in_specs=[vmem, vmem],
        out_specs=vmem,
        cost_estimate=pl.CostEstimate(flops=flops, transcendentals=COUT,
                                      bytes_accessed=bytes_accessed),
    )(wp, rhs)

    # (NUM_CAT, COUT, N*Ho*Wo) -> (N, NUM_CAT*COUT, Ho, Wo); group-major channel order
    # matches torch.cat(4 * [y], dim=1).
    out = out_pad[:, :COUT, :l].reshape(NUM_CAT, COUT, n, ho, wo)
    return jnp.transpose(out, (2, 0, 1, 3, 4)).reshape(n, NUM_CAT * COUT, ho, wo)


conv_bn_cat_add = jax.jit(_conv_bn_cat_add)


def _reference_impl(x1, x2, w, b, gamma, beta):
    """Pure-JAX reference with the same semantics (silent correctness check)."""
    def conv(x):
        y = jax.lax.conv_general_dilated(
            x, w, window_strides=(1, 1), padding="VALID",
            dimension_numbers=("NCHW", "OIHW", "NCHW"))
        return y + b[None, :, None, None]

    y1 = conv(x1)
    y2 = conv(x2)
    mean = jnp.mean(y1, axis=(0, 2, 3), keepdims=True)
    var = jnp.mean((y1 - mean) ** 2, axis=(0, 2, 3), keepdims=True)
    y = (y1 - mean) / jnp.sqrt(var + BN_EPS)
    y = y * gamma[None, :, None, None] + beta[None, :, None, None]
    out = jnp.concatenate(NUM_CAT * [y], axis=1)
    y2_t = jnp.concatenate(NUM_CAT * [y2], axis=1)
    return y2_t + out


_reference = jax.jit(_reference_impl)


if __name__ == "__main__":
    key = jax.random.PRNGKey(0)
    k1, k2, k3, k4 = jax.random.split(key, 4)

    # Small shapes consistent with the module: batch=2, 3 channels, 10x10 spatial for x1
    # (-> 8x8 conv output, so N*Ho*Wo = 128 lanes exactly); 3x3 spatial for x2 (-> 1x1 conv
    # output that broadcasts over spatial dims, mirroring the 1x1-spatial x2 intent).
    N = 2
    x1 = jax.random.normal(k1, (N, 3, 10, 10), dtype=jnp.float32)
    x2 = jax.random.normal(k2, (N, 3, 3, 3), dtype=jnp.float32)

    # Deterministic Conv2d(3, 3, 3) init (PyTorch default: U(-1/sqrt(fan_in), 1/sqrt(fan_in))).
    fan_in = CIN * KH * KW
    bound = 1.0 / math.sqrt(fan_in)
    w = jax.random.uniform(k3, (COUT, CIN, KH, KW), jnp.float32, -bound, bound)
    b = jax.random.uniform(k4, (COUT,), jnp.float32, -bound, bound)

    # BatchNorm2d(3) default affine params.
    gamma = jnp.ones((COUT,), jnp.float32)
    beta = jnp.zeros((COUT,), jnp.float32)

    out = conv_bn_cat_add(x1, x2, w, b, gamma, beta)
    out = jax.block_until_ready(out)

    assert out.shape == (N, NUM_CAT * COUT, 8, 8), out.shape

    ref = jax.block_until_ready(_reference(x1, x2, w, b, gamma, beta))
    assert jnp.allclose(out, ref, atol=1e-4, rtol=1e-4), "mismatch vs JAX reference"

    print("KERNEL_OK")
</pallas_src>

<mosaic_0001>
module attributes {stable_mosaic.version = 11 : i64} {
  func.func @kernel(%arg0: memref<3x32xf32, #tpu.memory_space<vmem>>, %arg1: memref<32x256xf32, #tpu.memory_space<vmem>>, %arg2: memref<4x8x128xf32, #tpu.memory_space<vmem>>) attributes {dimension_semantics = [], scalar_prefetch = 0 : i64, scratch_operands = 0 : i64, tpu.core_type = #tpu.core_type<tc>} {
    %c0 = arith.constant 0 : index
    %c0_0 = arith.constant 0 : index
    %0 = vector.load %arg0[%c0, %c0_0] : memref<3x32xf32, #tpu.memory_space<vmem>>, vector<3x32xf32>
    %1 = vector.extract_strided_slice %0 {offsets = [0, 27], sizes = [3, 1], strides = [1, 1]} : vector<3x32xf32> to vector<3x1xf32>
    %2 = vector.extract_strided_slice %0 {offsets = [0, 28], sizes = [3, 1], strides = [1, 1]} : vector<3x32xf32> to vector<3x1xf32>
    %3 = vector.extract_strided_slice %0 {offsets = [0, 29], sizes = [3, 1], strides = [1, 1]} : vector<3x32xf32> to vector<3x1xf32>
    %c0_1 = arith.constant 0 : index
    %c0_2 = arith.constant 0 : index
    %4 = vector.load %arg1[%c0_1, %c0_2] : memref<32x256xf32, #tpu.memory_space<vmem>>, vector<32x256xf32>
    %cst = arith.constant dense<0.000000e+00> : vector<3x256xf32>
    %5 = tpu.matmul %0, %4, %cst {dimension_numbers = #tpu.dot_dimension_numbers<[1], [0], [0], [1], [0, 0, 1, 1], [], []>} : vector<3x32xf32>, vector<32x256xf32>, vector<3x256xf32> -> vector<3x256xf32>
    %6 = vector.extract_strided_slice %5 {offsets = [0, 0], sizes = [3, 128], strides = [1, 1]} : vector<3x256xf32> to vector<3x128xf32>
    %7 = vector.extract_strided_slice %5 {offsets = [0, 128], sizes = [3, 128], strides = [1, 1]} : vector<3x256xf32> to vector<3x128xf32>
    %8 = vector.broadcast %1 : vector<3x1xf32> to vector<3x128xf32>
    %9 = arith.addf %7, %8 : vector<3x128xf32>
    %10 = arith.mulf %6, %6 : vector<3x128xf32>
    %11 = tpu.concatenate %6, %10 in 0 : vector<3x128xf32>, vector<3x128xf32> -> vector<6x128xf32>
    %cst_3 = arith.constant dense<0.000000e+00> : vector<6xf32>
    %12 = vector.multi_reduction <add>, %11, %cst_3 [1] : vector<6x128xf32> to vector<6xf32>
    %13 = vector.shape_cast %12 : vector<6xf32> to vector<6x1xf32>
    %14 = vector.extract_strided_slice %13 {offsets = [0, 0], sizes = [3, 1], strides = [1, 1]} : vector<6x1xf32> to vector<3x1xf32>
    %cst_4 = arith.constant 7.812500e-03 : f32
    %15 = vector.broadcast %cst_4 : f32 to vector<3x1xf32>
    %16 = arith.mulf %14, %15 : vector<3x1xf32>
    %17 = vector.extract_strided_slice %13 {offsets = [3, 0], sizes = [3, 1], strides = [1, 1]} : vector<6x1xf32> to vector<3x1xf32>
    %cst_5 = arith.constant 7.812500e-03 : f32
    %18 = vector.broadcast %cst_5 : f32 to vector<3x1xf32>
    %19 = arith.mulf %17, %18 : vector<3x1xf32>
    %20 = arith.mulf %16, %16 : vector<3x1xf32>
    %21 = arith.subf %19, %20 : vector<3x1xf32>
    %cst_6 = arith.constant 0.000000e+00 : f32
    %22 = vector.broadcast %cst_6 : f32 to vector<3x1xf32>
    %23 = arith.maximumf %21, %22 : vector<3x1xf32>
    %cst_7 = arith.constant 9.99999974E-6 : f32
    %24 = vector.broadcast %cst_7 : f32 to vector<3x1xf32>
    %25 = arith.addf %23, %24 : vector<3x1xf32>
    %26 = math.rsqrt %25 : vector<3x1xf32>
    %27 = vector.broadcast %16 : vector<3x1xf32> to vector<3x128xf32>
    %28 = arith.subf %6, %27 : vector<3x128xf32>
    %29 = arith.mulf %26, %2 : vector<3x1xf32>
    %30 = vector.broadcast %29 : vector<3x1xf32> to vector<3x128xf32>
    %31 = arith.mulf %28, %30 : vector<3x128xf32>
    %32 = vector.broadcast %3 : vector<3x1xf32> to vector<3x128xf32>
    %33 = arith.addf %31, %32 : vector<3x128xf32>
    %34 = arith.addf %33, %9 : vector<3x128xf32>
    %cst_8 = arith.constant 0.000000e+00 : f32
    %35 = vector.broadcast %cst_8 : f32 to vector<5x128xf32>
    %36 = tpu.concatenate %34, %35 in 0 : vector<3x128xf32>, vector<5x128xf32> -> vector<8x128xf32>
    %c0_9 = arith.constant 0 : index
    %c0_10 = arith.constant 0 : index
    %c0_11 = arith.constant 0 : index
    %37 = vector.load %arg2[%c0_9, %c0_10, %c0_11] : memref<4x8x128xf32, #tpu.memory_space<vmem>>, vector<1x8x128xf32>
    %38 = vector.shape_cast %37 : vector<1x8x128xf32> to vector<8x128xf32>
    %39 = vector.shape_cast %36 : vector<8x128xf32> to vector<1x8x128xf32>
    tpu.vector_store %arg2[%c0_9, %c0_10, %c0_11], %39 {strides = array<i32>} : memref<4x8x128xf32, #tpu.memory_space<vmem>>, vector<1x8x128xf32>,
    %c1 = arith.constant 1 : index
    %c0_12 = arith.constant 0 : index
    %c0_13 = arith.constant 0 : index
    %40 = vector.load %arg2[%c1, %c0_12, %c0_13] : memref<4x8x128xf32, #tpu.memory_space<vmem>>, vector<1x8x128xf32>
    %41 = vector.shape_cast %40 : vector<1x8x128xf32> to vector<8x128xf32>
    %42 = vector.shape_cast %36 : vector<8x128xf32> to vector<1x8x128xf32>
    tpu.vector_store %arg2[%c1, %c0_12, %c0_13], %42 {strides = array<i32>} : memref<4x8x128xf32, #tpu.memory_space<vmem>>, vector<1x8x128xf32>,
    %c2 = arith.constant 2 : index
    %c0_14 = arith.constant 0 : index
    %c0_15 = arith.constant 0 : index
    %43 = vector.load %arg2[%c2, %c0_14, %c0_15] : memref<4x8x128xf32, #tpu.memory_space<vmem>>, vector<1x8x128xf32>
    %44 = vector.shape_cast %43 : vector<1x8x128xf32> to vector<8x128xf32>
    %45 = vector.shape_cast %36 : vector<8x128xf32> to vector<1x8x128xf32>
    tpu.vector_store %arg2[%c2, %c0_14, %c0_15], %45 {strides = array<i32>} : memref<4x8x128xf32, #tpu.memory_space<vmem>>, vector<1x8x128xf32>,
    %c3 = arith.constant 3 : index
    %c0_16 = arith.constant 0 : index
    %c0_17 = arith.constant 0 : index
    %46 = vector.load %arg2[%c3, %c0_16, %c0_17] : memref<4x8x128xf32, #tpu.memory_space<vmem>>, vector<1x8x128xf32>
    %47 = vector.shape_cast %46 : vector<1x8x128xf32> to vector<8x128xf32>
    %48 = vector.shape_cast %36 : vector<8x128xf32> to vector<1x8x128xf32>
    tpu.vector_store %arg2[%c3, %c0_16, %c0_17], %48 {strides = array<i32>} : memref<4x8x128xf32, #tpu.memory_space<vmem>>, vector<1x8x128xf32>,
    return
  }
}

</mosaic_0001>

<llo_original>
// kernel: _conv_bn_cat_add.1
$region0: #{_conv_bn_cat_add.1}
  #allocation0 [shape = 'u32[]', space=smem, size = 0x4, offset = 0x4, fixed_abs, tag = 'smem constant byte address 0x4 - core index']
  #allocation1 [shape = 'u32[144,128]{1,0:T(1,128)}', space=vmem, size = 0x12000, scoped, tag = 'internal scratch']
  %s0 = inlined_call_operand.vmem [shape: f32[3,32], index: 0, kind: input, shape index: {}]
  %s1 = inlined_call_operand.vmem [shape: f32[32,256], index: 1, kind: input, shape index: {}]
  %s2 = inlined_call_operand.vmem [shape: f32[4,8,128], index: 2, kind: output, shape index: {}]
  %s3 = sld [smem:[#allocation0]]
  $region18: #{_conv_bn_cat_add.1} parent=0
    _
  %s5 = ssub.s32 1, %s3
  %s6 = scalar_select 0, %s5, %s3
  // Predicated region
  $region2: #{_conv_bn_cat_add.1} parent=0 // pred_check
    _
  $region3: #{_conv_bn_cat_add.1} parent=0 // pred_check_branch
    %8 = sbr.rel (0) target = $region5
  $region4: #{_conv_bn_cat_add.1} parent=0 // pred_region
    _
  $region5: #{_conv_bn_cat_add.1} parent=0 // pred_fallthru
    _
  // Predicated region
  $region6: #{_conv_bn_cat_add.1} parent=0 // pred_check
    _
  $region7: #{_conv_bn_cat_add.1} parent=0 // pred_check_branch
    %10 = sbr.rel (0) target = $region9
  $region8: #{_conv_bn_cat_add.1} parent=0 // pred_region
    _
  $region9: #{_conv_bn_cat_add.1} parent=0 // pred_fallthru
    _
  %v11 = vld [vmem:[%s0] sm:$0x7]
  %v12 = vld [vmem:[%s1] sm:$0xff]
  %v13 = vld [vmem:[%s1 + $0x8] sm:$0xff]
  %v14 = vld [vmem:[%s1 + $0x10] sm:$0xff]
  %v15 = vld [vmem:[%s1 + $0x18] sm:$0xff]
  %v16 = vld [vmem:[%s1 + $0x20] sm:$0xff]
  %v17 = vld [vmem:[%s1 + $0x28] sm:$0xff]
  %v18 = vld [vmem:[%s1 + $0x30] sm:$0xff]
  %v19 = vld [vmem:[%s1 + $0x38] sm:$0xff]
  %vm20 = vcmask 261120
  %v22 = vsel %vm20, %v11, 0
  %24 = vmatprep.subr.mxu0 %v13
  %25 = vmatpush1.msra.mxu0 %v12
  %26 = vmatprep.subr.mxu0 %v15
  %27 = vmatpush1.msra.mxu0 %v14
  %28 = vmatprep.subr.mxu0 %v17
  %29 = vmatpush1.msra.mxu0 %v16
  %30 = vmatprep.subr.mxu0 %v19
  %31 = vmatpush1.msra.mxu0 %v18
  %32 = vmatprep.subr.mxu0 0.0
  %33 = vmatpush1.msra.mxu0 0.0
  %34 = vmatprep.subr.mxu0 0.0
  %35 = vmatpush1.msra.mxu0 0.0
  %36 = vmatprep.subr.mxu0 0.0
  %37 = vmatpush1.msra.mxu0 0.0
  %38 = vmatprep.subr.mxu0 0.0
  %39 = vmatpush1.msra.mxu0 0.0
  %40 = vmatprep.subr.mxu0 0.0
  %41 = vmatpush1.msra.mxu0 0.0
  %42 = vmatprep.subr.mxu0 0.0
  %43 = vmatpush1.msra.mxu0 0.0
  %44 = vmatprep.subr.mxu0 0.0
  %45 = vmatpush1.msra.mxu0 0.0
  %46 = vmatprep.subr.mxu0 0.0
  %47 = vmatpush1.msra.mxu0 0.0
  %48 = vmatprep.subr.mxu0 0.0
  %49 = vmatpush1.msra.mxu0 0.0
  %50 = vmatprep.subr.mxu0 0.0
  %51 = vmatpush1.msra.mxu0 0.0
  %52 = vmatprep.subr.mxu0 0.0
  %53 = vmatpush1.msra.mxu0 0.0
  %54 = vmatprep.subr.mxu0 0.0
  %55 = vmatpush1.msra.mxu0 0.0
  %56 = vmatprep.subr.mxu0 0.0
  %57 = vmatpush1.msra.mxu0 0.0
  %58 = vmatprep.subr.mxu0 0.0
  %59 = vmatpush1.msra.mxu0 0.0
  %60 = vmatprep.subr.mxu0 0.0
  %61 = vmatpush1.msra.mxu0 0.0
  %62 = vmatprep.subr.mxu0 0.0
  %63 = vmatpush1.msra.mxu0 0.0
  %64 = vmatprep.subr.mxu0 0.0
  %65 = vmatpush1.msra.mxu0 0.0
  %66 = vmatprep.subr.mxu0 0.0
  %67 = vmatpush1.msra.mxu0 0.0
  %68 = vmatprep.subr.mxu0 0.0
  %69 = vmatpush1.msra.mxu0 0.0
  %70 = vmatprep.subr.mxu0 0.0
  %71 = vmatpush1.msra.mxu0 0.0
  %72 = vmatprep.subr.mxu0 0.0
  %73 = vmatpush1.msra.mxu0 0.0
  %74 = vmatprep.subr.mxu0 0.0
  %75 = vmatpush1.msra.mxu0 0.0
  %76 = vmatprep.subr.mxu0 0.0
  %77 = vmatpush1.msra.mxu0 0.0
  %78 = vmatprep.subr.mxu0 0.0
  %79 = vmatpush1.msra.mxu0 0.0
  %80 = vmatprep.subr.mxu0 0.0
  %81 = vmatpush1.msra.mxu0 0.0
  %82 = vmatprep.subr.mxu0 0.0
  %83 = vmatpush1.msra.mxu0 0.0
  %84 = vmatprep.subr.mxu0 0.0
  %85 = vmatpush1.msra.mxu0 0.0
  %86 = vmatprep.subr.mxu0 0.0
  %87 = vmatpush1.msra.mxu0 0.0
  %88 = vmatprep.mubr.f32.mxu0 0.0
  %89 = vmatmul.mubr.f32.gmra.mrb[0].mxu0 %v22
  %v90 = vpop.f32.mrb[0].mxu0
  %v91 = vadd.f32 0.0, %v90
  %v92 = vpop.f32.mrb[0].mxu0
  %v93 = vadd.f32 0.0, %v92
  %94 = vdwg.mxu0
  %95 = vset.pattern.permute.xlu0 27
  %96 = vperm.xlu0 %95, %v11
  %v97 = vpop.permute.xlu0 %96
  %v99 = vadd.f32 %v93, %v97
  %v100 = vmul.f32 %v91, %v91
  %v102 = vrot.slane %v100, 5
  %vm104 = vcmask 1042432
  %v105 = vsel %vm104, %v91, %v102
  %vm106 = vcmask 1045504
  %v107 = vsel %vm106, %v105, 0.0
  %108 = vadd.xlane.f32.xlu0 %v107
  %v109 = vpop.xlane.xlu0 %108
  %v110 = vmul.f32 %v109, 0.0078125
  %v111 = vmul.f32 %v110, %v110
  %v113 = vrot.slane %v111, 5
  %v115 = vsub.f32 %v110, %v113
  %v116 = vmax.f32 %v115, 0.0
  %v117 = vadd.f32 %v116, 1e-05
  %v118 = vrsqrt.pop %v117
  %v119 = vsub.f32 %v91, %v110
  %v120 = vrot.slane %v11, 5
  %121 = vrot.lane.b32.xlu0 %v120, 100
  %v122 = vpop.permute.xlu0 %121
  %v124 = vmul.f32 %v118, %v122
  %126 = vset.pattern.permute.xlu0 0
  %127 = vperm.xlu0 %126, %v124
  %v128 = vpop.permute.xlu0 %127
  %v129 = vrot.slane %v128, 3
  %v131 = vmul.f32 %v119, %v129
  %132 = vset.pattern.permute.xlu0 29
  %133 = vperm.xlu0 %132, %v11
  %v134 = vpop.permute.xlu0 %133
  %v136 = vadd.f32 %v131, %v134
  %v137 = vadd.f32 %v136, %v99
  %v138 = vsel %vm104, %v137, 0.0
  %139 = vst [vmem:[%s2] sm:$0xff] %v138
  %s140 = scalar_lea.vmem %s2, 8
  %141 = vst [vmem:[%s140] sm:$0xff] %v138
  %s142 = scalar_lea.vmem %s2, 16
  %143 = vst [vmem:[%s142] sm:$0xff] %v138
  %s144 = scalar_lea.vmem %s2, 24
  %145 = vst [vmem:[%s144] sm:$0xff] %v138
  // Predicated region
  $region10: #{_conv_bn_cat_add.1} parent=0 // pred_check
    _
  $region11: #{_conv_bn_cat_add.1} parent=0 // pred_check_branch
    %147 = sbr.rel (0) target = $region13
  $region12: #{_conv_bn_cat_add.1} parent=0 // pred_region
    _
  $region13: #{_conv_bn_cat_add.1} parent=0 // pred_fallthru
    _
  // Predicated region
  $region14: #{_conv_bn_cat_add.1} parent=0 // pred_check
    _
  $region15: #{_conv_bn_cat_add.1} parent=0 // pred_check_branch
    %149 = sbr.rel (0) target = $region17
  $region16: #{_conv_bn_cat_add.1} parent=0 // pred_region
    _
  $region17: #{_conv_bn_cat_add.1} parent=0 // pred_fallthru
    _

</llo_original>
